<compile_context>
chip_gen: v7x
topology: tpu7x:2x2x1
jax: 0.10.0
libtpu: 0.0.40
codegen_flags: <defaults>
</compile_context>

<pallas_src>
import jax
import jax.numpy as jnp
from jax.experimental import pallas as pl
from jax.experimental.pallas import tpu as pltpu


KSIZE = 5
COUT = 32
EPS = 1e-5


def conv_relu_bn_kernel(patches_ref, w_ref, p_ref, o_ref):
    # patches_ref: (N, K, M)   K = 25 taps on sublanes, M = OH*OW on lanes
    # w_ref:       (COUT, K)
    # p_ref:       (COUT, 3)   columns = [conv bias, bn gamma, bn beta]
    # o_ref:       (N, COUT, M)
    n_batch = o_ref.shape[0]
    m_per_sample = o_ref.shape[2]
    m_total = n_batch * m_per_sample

    w = w_ref[...]                      # (COUT, K)
    params = p_ref[...]                 # (COUT, 3)
    bias = params[:, 0:1]               # (COUT, 1) broadcast along lanes
    gamma = params[:, 1:2]
    beta = params[:, 2:3]

    ys = []
    s1 = jnp.zeros((COUT, 1), jnp.float32)   # sum(y)   per channel
    s2 = jnp.zeros((COUT, 1), jnp.float32)   # sum(y^2) per channel
    for n in range(n_batch):                 # N is tiny (2): static unroll
        # conv-as-matmul, channel-leading so the result is lane-dense in M
        y = jnp.dot(w, patches_ref[n], preferred_element_type=jnp.float32)
        y = jnp.maximum(y + bias, 0.0)       # bias + ReLU
        ys.append(y)
        s1 = s1 + jnp.sum(y, axis=1, keepdims=True)
        s2 = s2 + jnp.sum(y * y, axis=1, keepdims=True)

    # Single-pass training-mode BatchNorm statistics (biased variance).
    inv_m = 1.0 / m_total
    mean = s1 * inv_m
    var = jnp.maximum(s2 * inv_m - mean * mean, 0.0)
    scale = gamma * jax.lax.rsqrt(var + EPS)   # gamma folded into the scale
    shift = beta - mean * scale

    for n in range(n_batch):
        o_ref[n] = ys[n] * scale + shift


def layer0_forward(x_nchw, conv_w, conv_b, bn_gamma, bn_beta):
    """x_nchw: (N, 1, H, W) float32.  Returns (N, 32, H-4, W-4) float32."""
    N, Cin, H, W = x_nchw.shape
    assert Cin == 1
    OH, OW = H - KSIZE + 1, W - KSIZE + 1
    M = OH * OW
    K = Cin * KSIZE * KSIZE

    # im2col directly in (N, K, M) layout: K on sublanes, M on lanes.
    # Only slices + stack + a trailing-dim merge (no transpose, no (M, K)
    # lane-padded blow-up).
    x0 = x_nchw[:, 0]                                        # (N, H, W)
    cols = [x0[:, di:di + OH, dj:dj + OW]                    # (N, OH, OW)
            for di in range(KSIZE) for dj in range(KSIZE)]
    patches = jnp.stack(cols, axis=1).reshape(N, K, M)       # (N, 25, 144)

    w2d = conv_w.reshape(COUT, K)                            # (32, 25), tap order di*5+dj
    params = jnp.stack([conv_b, bn_gamma, bn_beta], axis=1)  # (32, 3) packed

    out = pl.pallas_call(
        conv_relu_bn_kernel,
        out_shape=jax.ShapeDtypeStruct((N, COUT, M), jnp.float32),
        in_specs=[
            pl.BlockSpec(memory_space=pltpu.MemorySpace.VMEM),  # patches
            pl.BlockSpec(memory_space=pltpu.MemorySpace.VMEM),  # weights
            pl.BlockSpec(memory_space=pltpu.MemorySpace.VMEM),  # packed bias/gamma/beta
        ],
        out_specs=pl.BlockSpec(memory_space=pltpu.MemorySpace.VMEM),
    )(patches, w2d, params)

    # (N, COUT, OH*OW) -> (N, COUT, OH, OW): pure trailing-dim split, no transpose.
    return out.reshape(N, COUT, OH, OW)


if __name__ == "__main__":
    key = jax.random.PRNGKey(0)
    kx, kw, kb = jax.random.split(key, 3)

    # Input consistent with Conv2d(1, 32, 5, 1): N=2, C=1, H=W=16
    x = jax.random.normal(kx, (2, 1, 16, 16), dtype=jnp.float32)

    # Deterministic parameter init (synthetic; same shapes as the PyTorch module).
    fan_in = 1 * KSIZE * KSIZE
    bound = 1.0 / (fan_in ** 0.5)
    conv_w = jax.random.uniform(kw, (COUT, 1, KSIZE, KSIZE),
                                minval=-bound, maxval=bound, dtype=jnp.float32)
    conv_b = jax.random.uniform(kb, (COUT,),
                                minval=-bound, maxval=bound, dtype=jnp.float32)
    bn_gamma = jnp.ones((COUT,), jnp.float32)   # PyTorch BatchNorm default weight
    bn_beta = jnp.zeros((COUT,), jnp.float32)   # PyTorch BatchNorm default bias

    out = layer0_forward(x, conv_w, conv_b, bn_gamma, bn_beta)
    jax.block_until_ready(out)
    assert out.shape == (2, COUT, 12, 12), out.shape
    print("KERNEL_OK")
</pallas_src>

<mosaic_0001>
module attributes {stable_mosaic.version = 11 : i64} {
  func.func @conv_relu_bn_kernel(%arg0: memref<2x25x144xf32, #tpu.memory_space<vmem>>, %arg1: memref<32x25xf32, #tpu.memory_space<vmem>>, %arg2: memref<32x3xf32, #tpu.memory_space<vmem>>, %arg3: memref<2x32x144xf32, #tpu.memory_space<vmem>>) attributes {dimension_semantics = [], scalar_prefetch = 0 : i64, scratch_operands = 0 : i64, tpu.core_type = #tpu.core_type<tc>} {
    %c0 = arith.constant 0 : index
    %c0_0 = arith.constant 0 : index
    %0 = vector.load %arg1[%c0, %c0_0] : memref<32x25xf32, #tpu.memory_space<vmem>>, vector<32x25xf32>
    %c0_1 = arith.constant 0 : index
    %c0_2 = arith.constant 0 : index
    %1 = vector.load %arg2[%c0_1, %c0_2] : memref<32x3xf32, #tpu.memory_space<vmem>>, vector<32x3xf32>
    %2 = vector.extract_strided_slice %1 {offsets = [0, 0], sizes = [32, 1], strides = [1, 1]} : vector<32x3xf32> to vector<32x1xf32>
    %3 = vector.extract_strided_slice %1 {offsets = [0, 1], sizes = [32, 1], strides = [1, 1]} : vector<32x3xf32> to vector<32x1xf32>
    %4 = vector.extract_strided_slice %1 {offsets = [0, 2], sizes = [32, 1], strides = [1, 1]} : vector<32x3xf32> to vector<32x1xf32>
    %cst = arith.constant 0.000000e+00 : f32
    %5 = vector.broadcast %cst : f32 to vector<32x1xf32>
    %cst_3 = arith.constant 0.000000e+00 : f32
    %6 = vector.broadcast %cst_3 : f32 to vector<32x1xf32>
    %c0_4 = arith.constant 0 : index
    %c0_5 = arith.constant 0 : index
    %c0_6 = arith.constant 0 : index
    %7 = vector.load %arg0[%c0_4, %c0_5, %c0_6] : memref<2x25x144xf32, #tpu.memory_space<vmem>>, vector<1x25x144xf32>
    %8 = vector.shape_cast %7 : vector<1x25x144xf32> to vector<25x144xf32>
    %cst_7 = arith.constant dense<0.000000e+00> : vector<32x144xf32>
    %9 = tpu.matmul %0, %8, %cst_7 {dimension_numbers = #tpu.dot_dimension_numbers<[1], [0], [0], [1], [0, 0, 1, 1], [], []>} : vector<32x25xf32>, vector<25x144xf32>, vector<32x144xf32> -> vector<32x144xf32>
    %10 = vector.broadcast %2 : vector<32x1xf32> to vector<32x144xf32>
    %11 = arith.addf %9, %10 : vector<32x144xf32>
    %cst_8 = arith.constant 0.000000e+00 : f32
    %12 = vector.broadcast %cst_8 : f32 to vector<32x144xf32>
    %13 = arith.maximumf %11, %12 : vector<32x144xf32>
    %cst_9 = arith.constant dense<0.000000e+00> : vector<32xf32>
    %14 = vector.multi_reduction <add>, %13, %cst_9 [1] : vector<32x144xf32> to vector<32xf32>
    %15 = vector.shape_cast %14 : vector<32xf32> to vector<32x1xf32>
    %16 = arith.addf %5, %15 : vector<32x1xf32>
    %17 = arith.mulf %13, %13 : vector<32x144xf32>
    %cst_10 = arith.constant dense<0.000000e+00> : vector<32xf32>
    %18 = vector.multi_reduction <add>, %17, %cst_10 [1] : vector<32x144xf32> to vector<32xf32>
    %19 = vector.shape_cast %18 : vector<32xf32> to vector<32x1xf32>
    %20 = arith.addf %6, %19 : vector<32x1xf32>
    %c1 = arith.constant 1 : index
    %c0_11 = arith.constant 0 : index
    %c0_12 = arith.constant 0 : index
    %21 = vector.load %arg0[%c1, %c0_11, %c0_12] : memref<2x25x144xf32, #tpu.memory_space<vmem>>, vector<1x25x144xf32>
    %22 = vector.shape_cast %21 : vector<1x25x144xf32> to vector<25x144xf32>
    %cst_13 = arith.constant dense<0.000000e+00> : vector<32x144xf32>
    %23 = tpu.matmul %0, %22, %cst_13 {dimension_numbers = #tpu.dot_dimension_numbers<[1], [0], [0], [1], [0, 0, 1, 1], [], []>} : vector<32x25xf32>, vector<25x144xf32>, vector<32x144xf32> -> vector<32x144xf32>
    %24 = vector.broadcast %2 : vector<32x1xf32> to vector<32x144xf32>
    %25 = arith.addf %23, %24 : vector<32x144xf32>
    %cst_14 = arith.constant 0.000000e+00 : f32
    %26 = vector.broadcast %cst_14 : f32 to vector<32x144xf32>
    %27 = arith.maximumf %25, %26 : vector<32x144xf32>
    %cst_15 = arith.constant dense<0.000000e+00> : vector<32xf32>
    %28 = vector.multi_reduction <add>, %27, %cst_15 [1] : vector<32x144xf32> to vector<32xf32>
    %29 = vector.shape_cast %28 : vector<32xf32> to vector<32x1xf32>
    %30 = arith.addf %16, %29 : vector<32x1xf32>
    %31 = arith.mulf %27, %27 : vector<32x144xf32>
    %cst_16 = arith.constant dense<0.000000e+00> : vector<32xf32>
    %32 = vector.multi_reduction <add>, %31, %cst_16 [1] : vector<32x144xf32> to vector<32xf32>
    %33 = vector.shape_cast %32 : vector<32xf32> to vector<32x1xf32>
    %34 = arith.addf %20, %33 : vector<32x1xf32>
    %cst_17 = arith.constant 0.00347222225 : f32
    %35 = vector.broadcast %cst_17 : f32 to vector<32x1xf32>
    %36 = arith.mulf %30, %35 : vector<32x1xf32>
    %cst_18 = arith.constant 0.00347222225 : f32
    %37 = vector.broadcast %cst_18 : f32 to vector<32x1xf32>
    %38 = arith.mulf %34, %37 : vector<32x1xf32>
    %39 = arith.mulf %36, %36 : vector<32x1xf32>
    %40 = arith.subf %38, %39 : vector<32x1xf32>
    %cst_19 = arith.constant 0.000000e+00 : f32
    %41 = vector.broadcast %cst_19 : f32 to vector<32x1xf32>
    %42 = arith.maximumf %40, %41 : vector<32x1xf32>
    %cst_20 = arith.constant 9.99999974E-6 : f32
    %43 = vector.broadcast %cst_20 : f32 to vector<32x1xf32>
    %44 = arith.addf %42, %43 : vector<32x1xf32>
    %45 = math.rsqrt %44 : vector<32x1xf32>
    %46 = arith.mulf %3, %45 : vector<32x1xf32>
    %47 = arith.mulf %36, %46 : vector<32x1xf32>
    %48 = arith.subf %4, %47 : vector<32x1xf32>
    %49 = vector.broadcast %46 : vector<32x1xf32> to vector<32x144xf32>
    %50 = arith.mulf %13, %49 : vector<32x144xf32>
    %51 = vector.broadcast %48 : vector<32x1xf32> to vector<32x144xf32>
    %52 = arith.addf %50, %51 : vector<32x144xf32>
    %c0_21 = arith.constant 0 : index
    %c0_22 = arith.constant 0 : index
    %c0_23 = arith.constant 0 : index
    %53 = vector.load %arg3[%c0_21, %c0_22, %c0_23] : memref<2x32x144xf32, #tpu.memory_space<vmem>>, vector<1x32x144xf32>
    %54 = vector.shape_cast %53 : vector<1x32x144xf32> to vector<32x144xf32>
    %55 = vector.shape_cast %52 : vector<32x144xf32> to vector<1x32x144xf32>
    tpu.vector_store %arg3[%c0_21, %c0_22, %c0_23], %55 {strides = array<i32>} : memref<2x32x144xf32, #tpu.memory_space<vmem>>, vector<1x32x144xf32>,
    %56 = vector.broadcast %46 : vector<32x1xf32> to vector<32x144xf32>
    %57 = arith.mulf %27, %56 : vector<32x144xf32>
    %58 = vector.broadcast %48 : vector<32x1xf32> to vector<32x144xf32>
    %59 = arith.addf %57, %58 : vector<32x144xf32>
    %c1_24 = arith.constant 1 : index
    %c0_25 = arith.constant 0 : index
    %c0_26 = arith.constant 0 : index
    %60 = vector.load %arg3[%c1_24, %c0_25, %c0_26] : memref<2x32x144xf32, #tpu.memory_space<vmem>>, vector<1x32x144xf32>
    %61 = vector.shape_cast %60 : vector<1x32x144xf32> to vector<32x144xf32>
    %62 = vector.shape_cast %59 : vector<32x144xf32> to vector<1x32x144xf32>
    tpu.vector_store %arg3[%c1_24, %c0_25, %c0_26], %62 {strides = array<i32>} : memref<2x32x144xf32, #tpu.memory_space<vmem>>, vector<1x32x144xf32>,
    return
  }
}

</mosaic_0001>

<llo_original>
// kernel: tpu_custom_call.1
$region0: #{tpu_custom_call.1}
  #allocation0 [shape = 'u32[]', space=smem, size = 0x4, offset = 0x4, fixed_abs, tag = 'smem constant byte address 0x4 - core index']
  #allocation1 [shape = 'u32[144,128]{1,0:T(1,128)}', space=vmem, size = 0x12000, scoped, tag = 'internal scratch']
  %s0 = inlined_call_operand.vmem [shape: f32[2,25,144], index: 0, kind: input, shape index: {}]
  %s1 = inlined_call_operand.vmem [shape: f32[32,25], index: 1, kind: input, shape index: {}]
  %s2 = inlined_call_operand.vmem [shape: f32[32,3], index: 2, kind: input, shape index: {}]
  %s3 = inlined_call_operand.hbm [shape: f32[2,32,144], index: 3, kind: output, shape index: {}]
  %s4 = sld [smem:[#allocation0]]
  $region22: #{tpu_custom_call.1} parent=0
    _
  %s6 = ssub.s32 1, %s4
  %s7 = scalar_select 0, %s6, %s4
  $region1: #{tpu_custom_call.1} parent=0
    #allocation2 [shape = 'u8[65536]{0}', space=vmem, size = 0x10000, scoped, tag = 'output window, operand 0, single buffered']
    #allocation3 [shape = 's32[1]{0}', space=sflag, size = 0x4, scoped, tag = 'scoped memory for tpu_custom_call.1']
    %8 = vsyncpa [#allocation3], 0
    // Predicated region
    $region2: #{tpu_custom_call.1} parent=1 // pred_check
      _
    $region3: #{tpu_custom_call.1} parent=1 // pred_check_branch
      %10 = sbr.rel (0) target = $region5
    $region4: #{tpu_custom_call.1} parent=1 // pred_region
      _
    $region5: #{tpu_custom_call.1} parent=1 // pred_fallthru
      _
    // Predicated region
    $region6: #{tpu_custom_call.1} parent=1 // pred_check
      _
    $region7: #{tpu_custom_call.1} parent=1 // pred_check_branch
      %12 = sbr.rel (0) target = $region9
    $region8: #{tpu_custom_call.1} parent=1 // pred_region
      _
    $region9: #{tpu_custom_call.1} parent=1 // pred_fallthru
      _
    // Predicated region
    $region10: #{tpu_custom_call.1} parent=1 // pred_check
      _
    $region11: #{tpu_custom_call.1} parent=1 // pred_check_branch
      %14 = sbr.rel (0) target = $region13
    $region12: #{tpu_custom_call.1} parent=1 // pred_region
      _
    $region13: #{tpu_custom_call.1} parent=1 // pred_fallthru
      _
    %v15 = vld [vmem:[%s1] sm:$0xff]
    %v16 = vld [vmem:[%s1 + $0x8] sm:$0xff]
    %v17 = vld [vmem:[%s1 + $0x10] sm:$0xff]
    %v18 = vld [vmem:[%s1 + $0x18] sm:$0xff]
    %v19 = vld [vmem:[%s2] sm:$0xff]
    %v20 = vld [vmem:[%s2 + $0x8] sm:$0xff]
    %v21 = vld [vmem:[%s2 + $0x10] sm:$0xff]
    %v22 = vld [vmem:[%s2 + $0x18] sm:$0xff]
    %v23 = vld [vmem:[%s0] sm:$0xff]
    %v24 = vld [vmem:[%s0 + $0x8] sm:$0xff]
    %v25 = vld [vmem:[%s0 + $0x10] sm:$0xff]
    %v26 = vld [vmem:[%s0 + $0x18] sm:$0xff]
    %v27 = vld [vmem:[%s0 + $0x20] sm:$0xff]
    %v28 = vld [vmem:[%s0 + $0x28] sm:$0xff]
    %v29 = vld [vmem:[%s0 + $0x30] sm:$0x1]
    %v30 = vld [vmem:[%s0 + $0x38] sm:$0x1]
    %32 = vset.pattern.permute.xlu0 0
    %33 = vperm.xlu0 %32, %v19
    %v34 = vpop.permute.xlu0 %33
    %37 = vset.pattern.permute.xlu0 0
    %38 = vperm.xlu0 %37, %v20
    %v39 = vpop.permute.xlu0 %38
    %42 = vset.pattern.permute.xlu0 0
    %43 = vperm.xlu0 %42, %v21
    %v44 = vpop.permute.xlu0 %43
    %47 = vset.pattern.permute.xlu0 0
    %48 = vperm.xlu0 %47, %v22
    %v49 = vpop.permute.xlu0 %48
    %vm51 = vcmask 203776
    %v53 = vsel %vm51, %v15, 0
    %v56 = vsel %vm51, %v16, 0
    %v59 = vsel %vm51, %v17, 0
    %v62 = vsel %vm51, %v18, 0
    %vm64 = vcmask 1040384
    %v66 = vsel %vm64, %v29, 0
    %v69 = vsel %vm64, %v30, 0
    %71 = vmatprep.subr.mxu0 %v24
    %72 = vmatpush1.msra.mxu0 %v23
    %73 = vmatprep.subr.mxu0 %v26
    %74 = vmatpush1.msra.mxu0 %v25
    %75 = vmatprep.subr.mxu0 %v28
    %76 = vmatpush1.msra.mxu0 %v27
    %77 = vmatprep.subr.mxu0 %v69
    %78 = vmatpush1.msra.mxu0 %v66
    %79 = vmatprep.subr.mxu0 0.0
    %80 = vmatpush1.msra.mxu0 0.0
    %81 = vmatprep.subr.mxu0 0.0
    %82 = vmatpush1.msra.mxu0 0.0
    %83 = vmatprep.subr.mxu0 0.0
    %84 = vmatpush1.msra.mxu0 0.0
    %85 = vmatprep.subr.mxu0 0.0
    %86 = vmatpush1.msra.mxu0 0.0
    %87 = vmatprep.subr.mxu0 0.0
    %88 = vmatpush1.msra.mxu0 0.0
    %89 = vmatprep.subr.mxu0 0.0
    %90 = vmatpush1.msra.mxu0 0.0
    %91 = vmatprep.subr.mxu0 0.0
    %92 = vmatpush1.msra.mxu0 0.0
    %93 = vmatprep.subr.mxu0 0.0
    %94 = vmatpush1.msra.mxu0 0.0
    %95 = vmatprep.subr.mxu0 0.0
    %96 = vmatpush1.msra.mxu0 0.0
    %97 = vmatprep.subr.mxu0 0.0
    %98 = vmatpush1.msra.mxu0 0.0
    %99 = vmatprep.subr.mxu0 0.0
    %100 = vmatpush1.msra.mxu0 0.0
    %101 = vmatprep.subr.mxu0 0.0
    %102 = vmatpush1.msra.mxu0 0.0
    %103 = vmatprep.subr.mxu0 0.0
    %104 = vmatpush1.msra.mxu0 0.0
    %105 = vmatprep.subr.mxu0 0.0
    %106 = vmatpush1.msra.mxu0 0.0
    %107 = vmatprep.subr.mxu0 0.0
    %108 = vmatpush1.msra.mxu0 0.0
    %109 = vmatprep.subr.mxu0 0.0
    %110 = vmatpush1.msra.mxu0 0.0
    %111 = vmatprep.subr.mxu0 0.0
    %112 = vmatpush1.msra.mxu0 0.0
    %113 = vmatprep.subr.mxu0 0.0
    %114 = vmatpush1.msra.mxu0 0.0
    %115 = vmatprep.subr.mxu0 0.0
    %116 = vmatpush1.msra.mxu0 0.0
    %117 = vmatprep.subr.mxu0 0.0
    %118 = vmatpush1.msra.mxu0 0.0
    %119 = vmatprep.subr.mxu0 0.0
    %120 = vmatpush1.msra.mxu0 0.0
    %121 = vmatprep.subr.mxu0 0.0
    %122 = vmatpush1.msra.mxu0 0.0
    %123 = vmatprep.subr.mxu0 0.0
    %124 = vmatpush1.msra.mxu0 0.0
    %125 = vmatprep.subr.mxu0 0.0
    %126 = vmatpush1.msra.mxu0 0.0
    %127 = vmatprep.subr.mxu0 0.0
    %128 = vmatpush1.msra.mxu0 0.0
    %129 = vmatprep.subr.mxu0 0.0
    %130 = vmatpush1.msra.mxu0 0.0
    %131 = vmatprep.subr.mxu0 0.0
    %132 = vmatpush1.msra.mxu0 0.0
    %133 = vmatprep.subr.mxu0 0.0
    %134 = vmatpush1.msra.mxu0 0.0
    %135 = vmatprep.mubr.f32.mxu0 0.0
    %136 = vmatmul.mubr.f32.gmra.mrb[0].mxu0 %v53
    %v137 = vpop.f32.mrb[0].mxu0
    %v138 = vadd.f32 %v34, %v137
    %v139 = vpop.f32.mrb[0].mxu0
    %v140 = vadd.f32 %v34, %v139
    %141 = vmatprep.mubr.f32.mxu0 0.0
    %142 = vmatmul.mubr.f32.gmra.mrb[0].mxu0 %v56
    %v143 = vpop.f32.mrb[0].mxu0
    %v144 = vadd.f32 %v39, %v143
    %v145 = vpop.f32.mrb[0].mxu0
    %v146 = vadd.f32 %v39, %v145
    %147 = vmatprep.mubr.f32.mxu0 0.0
    %148 = vmatmul.mubr.f32.gmra.mrb[0].mxu0 %v59
    %v149 = vpop.f32.mrb[0].mxu0
    %v150 = vadd.f32 %v44, %v149
    %v151 = vpop.f32.mrb[0].mxu0
    %v152 = vadd.f32 %v44, %v151
    %153 = vmatprep.mubr.f32.mxu0 0.0
    %154 = vmatmul.mubr.f32.gmra.mrb[0].mxu0 %v62
    %v155 = vpop.f32.mrb[0].mxu0
    %v156 = vadd.f32 %v49, %v155
    %v157 = vpop.f32.mrb[0].mxu0
    %v158 = vadd.f32 %v49, %v157
    %159 = vdwg.mxu0
    %v160 = vmax.f32 %v138, 0.0
    %v161 = vmax.f32 %v140, 0.0
    %v162 = vmax.f32 %v144, 0.0
    %v163 = vmax.f32 %v146, 0.0
    %v164 = vmax.f32 %v150, 0.0
    %v165 = vmax.f32 %v152, 0.0
    %v166 = vmax.f32 %v156, 0.0
    %v167 = vmax.f32 %v158, 0.0
    %vm168 = vcmask 130048
    %v169 = vsel %vm168, %v161, 0.0
    %v170 = vadd.f32 %v160, %v169
    %171 = vadd.xlane.f32.xlu0 %v170
    %v172 = vpop.xlane.xlu0 %171
    %v173 = vsel %vm168, %v163, 0.0
    %v174 = vadd.f32 %v162, %v173
    %175 = vadd.xlane.f32.xlu0 %v174
    %v176 = vpop.xlane.xlu0 %175
    %v177 = vsel %vm168, %v165, 0.0
    %v178 = vadd.f32 %v164, %v177
    %179 = vadd.xlane.f32.xlu0 %v178
    %v180 = vpop.xlane.xlu0 %179
    %v181 = vsel %vm168, %v167, 0.0
    %v182 = vadd.f32 %v166, %v181
    %183 = vadd.xlane.f32.xlu0 %v182
    %v184 = vpop.xlane.xlu0 %183
    %v185 = vadd.f32 %v172, 0.0
    %v186 = vadd.f32 %v176, 0.0
    %v187 = vadd.f32 %v180, 0.0
    %v188 = vadd.f32 %v184, 0.0
    %v189 = vmul.f32 %v160, %v160
    %v190 = vmul.f32 %v161, %v161
    %v191 = vmul.f32 %v162, %v162
    %v192 = vmul.f32 %v163, %v163
    %v193 = vmul.f32 %v164, %v164
    %v194 = vmul.f32 %v165, %v165
    %v195 = vmul.f32 %v166, %v166
    %v196 = vmul.f32 %v167, %v167
    %v197 = vsel %vm168, %v190, 0.0
    %v198 = vadd.f32 %v189, %v197
    %199 = vadd.xlane.f32.xlu0 %v198
    %v200 = vpop.xlane.xlu0 %199
    %v201 = vsel %vm168, %v192, 0.0
    %v202 = vadd.f32 %v191, %v201
    %203 = vadd.xlane.f32.xlu0 %v202
    %v204 = vpop.xlane.xlu0 %203
    %v205 = vsel %vm168, %v194, 0.0
    %v206 = vadd.f32 %v193, %v205
    %207 = vadd.xlane.f32.xlu0 %v206
    %v208 = vpop.xlane.xlu0 %207
    %v209 = vsel %vm168, %v196, 0.0
    %v210 = vadd.f32 %v195, %v209
    %211 = vadd.xlane.f32.xlu0 %v210
    %v212 = vpop.xlane.xlu0 %211
    %v213 = vadd.f32 %v200, 0.0
    %v214 = vadd.f32 %v204, 0.0
    %v215 = vadd.f32 %v208, 0.0
    %v216 = vadd.f32 %v212, 0.0
    %s217 = scalar_lea.vmem %s0, 64
    %v218 = vld [vmem:[%s217] sm:$0xff]
    %v219 = vld [vmem:[%s217 + $0x8] sm:$0xff]
    %v220 = vld [vmem:[%s217 + $0x10] sm:$0xff]
    %v221 = vld [vmem:[%s217 + $0x18] sm:$0xff]
    %v222 = vld [vmem:[%s217 + $0x20] sm:$0xff]
    %v223 = vld [vmem:[%s217 + $0x28] sm:$0xff]
    %v224 = vld [vmem:[%s217 + $0x30] sm:$0x1]
    %v225 = vld [vmem:[%s217 + $0x38] sm:$0x1]
    %v227 = vsel %vm64, %v224, 0
    %v230 = vsel %vm64, %v225, 0
    %232 = vmatprep.subr.mxu0 %v219
    %233 = vmatpush1.msra.mxu0 %v218
    %234 = vmatprep.subr.mxu0 %v221
    %235 = vmatpush1.msra.mxu0 %v220
    %236 = vmatprep.subr.mxu0 %v223
    %237 = vmatpush1.msra.mxu0 %v222
    %238 = vmatprep.subr.mxu0 %v230
    %239 = vmatpush1.msra.mxu0 %v227
    %240 = vmatprep.subr.mxu0 0.0
    %241 = vmatpush1.msra.mxu0 0.0
    %242 = vmatprep.subr.mxu0 0.0
    %243 = vmatpush1.msra.mxu0 0.0
    %244 = vmatprep.subr.mxu0 0.0
    %245 = vmatpush1.msra.mxu0 0.0
    %246 = vmatprep.subr.mxu0 0.0
    %247 = vmatpush1.msra.mxu0 0.0
    %248 = vmatprep.subr.mxu0 0.0
    %249 = vmatpush1.msra.mxu0 0.0
    %250 = vmatprep.subr.mxu0 0.0
    %251 = vmatpush1.msra.mxu0 0.0
    %252 = vmatprep.subr.mxu0 0.0
    %253 = vmatpush1.msra.mxu0 0.0
    %254 = vmatprep.subr.mxu0 0.0
    %255 = vmatpush1.msra.mxu0 0.0
    %256 = vmatprep.subr.mxu0 0.0
    %257 = vmatpush1.msra.mxu0 0.0
    %258 = vmatprep.subr.mxu0 0.0
    %259 = vmatpush1.msra.mxu0 0.0
    %260 = vmatprep.subr.mxu0 0.0
    %261 = vmatpush1.msra.mxu0 0.0
    %262 = vmatprep.subr.mxu0 0.0
    %263 = vmatpush1.msra.mxu0 0.0
    %264 = vmatprep.subr.mxu0 0.0
    %265 = vmatpush1.msra.mxu0 0.0
    %266 = vmatprep.subr.mxu0 0.0
    %267 = vmatpush1.msra.mxu0 0.0
    %268 = vmatprep.subr.mxu0 0.0
    %269 = vmatpush1.msra.mxu0 0.0
    %270 = vmatprep.subr.mxu0 0.0
    %271 = vmatpush1.msra.mxu0 0.0
    %272 = vmatprep.subr.mxu0 0.0
    %273 = vmatpush1.msra.mxu0 0.0
    %274 = vmatprep.subr.mxu0 0.0
    %275 = vmatpush1.msra.mxu0 0.0
    %276 = vmatprep.subr.mxu0 0.0
    %277 = vmatpush1.msra.mxu0 0.0
    %278 = vmatprep.subr.mxu0 0.0
    %279 = vmatpush1.msra.mxu0 0.0
    %280 = vmatprep.subr.mxu0 0.0
    %281 = vmatpush1.msra.mxu0 0.0
    %282 = vmatprep.subr.mxu0 0.0
    %283 = vmatpush1.msra.mxu0 0.0
    %284 = vmatprep.subr.mxu0 0.0
    %285 = vmatpush1.msra.mxu0 0.0
    %286 = vmatprep.subr.mxu0 0.0
    %287 = vmatpush1.msra.mxu0 0.0
    %288 = vmatprep.subr.mxu0 0.0
    %289 = vmatpush1.msra.mxu0 0.0
    %290 = vmatprep.subr.mxu0 0.0
    %291 = vmatpush1.msra.mxu0 0.0
    %292 = vmatprep.subr.mxu0 0.0
    %293 = vmatpush1.msra.mxu0 0.0
    %294 = vmatprep.subr.mxu0 0.0
    %295 = vmatpush1.msra.mxu0 0.0
    %296 = vmatprep.mubr.f32.mxu0 0.0
    %297 = vmatmul.mubr.f32.gmra.mrb[0].mxu0 %v53
    %v298 = vpop.f32.mrb[0].mxu0
    %v299 = vadd.f32 %v34, %v298
    %v300 = vpop.f32.mrb[0].mxu0
    %v301 = vadd.f32 %v34, %v300
    %302 = vmatprep.mubr.f32.mxu0 0.0
    %303 = vmatmul.mubr.f32.gmra.mrb[0].mxu0 %v56
    %v304 = vpop.f32.mrb[0].mxu0
    %v305 = vadd.f32 %v39, %v304
    %v306 = vpop.f32.mrb[0].mxu0
    %v307 = vadd.f32 %v39, %v306
    %308 = vmatprep.mubr.f32.mxu0 0.0
    %309 = vmatmul.mubr.f32.gmra.mrb[0].mxu0 %v59
    %v310 = vpop.f32.mrb[0].mxu0
    %v311 = vadd.f32 %v44, %v310
    %v312 = vpop.f32.mrb[0].mxu0
    %v313 = vadd.f32 %v44, %v312
    %314 = vmatprep.mubr.f32.mxu0 0.0
    %315 = vmatmul.mubr.f32.gmra.mrb[0].mxu0 %v62
    %v316 = vpop.f32.mrb[0].mxu0
    %v317 = vadd.f32 %v49, %v316
    %v318 = vpop.f32.mrb[0].mxu0
    %v319 = vadd.f32 %v49, %v318
    %320 = vdwg.mxu0
    %v321 = vmax.f32 %v299, 0.0
    %v322 = vmax.f32 %v301, 0.0
    %v323 = vmax.f32 %v305, 0.0
    %v324 = vmax.f32 %v307, 0.0
    %v325 = vmax.f32 %v311, 0.0
    %v326 = vmax.f32 %v313, 0.0
    %v327 = vmax.f32 %v317, 0.0
    %v328 = vmax.f32 %v319, 0.0
    %v329 = vsel %vm168, %v322, 0.0
    %v330 = vadd.f32 %v321, %v329
    %331 = vadd.xlane.f32.xlu0 %v330
    %v332 = vpop.xlane.xlu0 %331
    %v333 = vsel %vm168, %v324, 0.0
    %v334 = vadd.f32 %v323, %v333
    %335 = vadd.xlane.f32.xlu0 %v334
    %v336 = vpop.xlane.xlu0 %335
    %v337 = vsel %vm168, %v326, 0.0
    %v338 = vadd.f32 %v325, %v337
    %339 = vadd.xlane.f32.xlu0 %v338
    %v340 = vpop.xlane.xlu0 %339
    %v341 = vsel %vm168, %v328, 0.0
    %v342 = vadd.f32 %v327, %v341
    %343 = vadd.xlane.f32.xlu0 %v342
    %v344 = vpop.xlane.xlu0 %343
    %v345 = vadd.f32 %v185, %v332
    %v346 = vadd.f32 %v186, %v336
    %v347 = vadd.f32 %v187, %v340
    %v348 = vadd.f32 %v188, %v344
    %v349 = vmul.f32 %v321, %v321
    %v350 = vmul.f32 %v322, %v322
    %v351 = vmul.f32 %v323, %v323
    %v352 = vmul.f32 %v324, %v324
    %v353 = vmul.f32 %v325, %v325
    %v354 = vmul.f32 %v326, %v326
    %v355 = vmul.f32 %v327, %v327
    %v356 = vmul.f32 %v328, %v328
    %v357 = vsel %vm168, %v350, 0.0
    %v358 = vadd.f32 %v349, %v357
    %359 = vadd.xlane.f32.xlu0 %v358
    %v360 = vpop.xlane.xlu0 %359
    %v361 = vsel %vm168, %v352, 0.0
    %v362 = vadd.f32 %v351, %v361
    %363 = vadd.xlane.f32.xlu0 %v362
    %v364 = vpop.xlane.xlu0 %363
    %v365 = vsel %vm168, %v354, 0.0
    %v366 = vadd.f32 %v353, %v365
    %367 = vadd.xlane.f32.xlu0 %v366
    %v368 = vpop.xlane.xlu0 %367
    %v369 = vsel %vm168, %v356, 0.0
    %v370 = vadd.f32 %v355, %v369
    %371 = vadd.xlane.f32.xlu0 %v370
    %v372 = vpop.xlane.xlu0 %371
    %v373 = vadd.f32 %v213, %v360
    %v374 = vadd.f32 %v214, %v364
    %v375 = vadd.f32 %v215, %v368
    %v376 = vadd.f32 %v216, %v372
    %v377 = vmul.f32 %v345, 0.0034722222
    %v378 = vmul.f32 %v346, 0.0034722222
    %v379 = vmul.f32 %v347, 0.0034722222
    %v380 = vmul.f32 %v348, 0.0034722222
    %v381 = vmul.f32 %v373, 0.0034722222
    %v382 = vmul.f32 %v374, 0.0034722222
    %v383 = vmul.f32 %v375, 0.0034722222
    %v384 = vmul.f32 %v376, 0.0034722222
    %v385 = vmul.f32 %v377, %v377
    %v386 = vmul.f32 %v378, %v378
    %v387 = vmul.f32 %v379, %v379
    %v388 = vmul.f32 %v380, %v380
    %v389 = vsub.f32 %v381, %v385
    %v390 = vsub.f32 %v382, %v386
    %v391 = vsub.f32 %v383, %v387
    %v392 = vsub.f32 %v384, %v388
    %v393 = vmax.f32 %v389, 0.0
    %v394 = vmax.f32 %v390, 0.0
    %v395 = vmax.f32 %v391, 0.0
    %v396 = vmax.f32 %v392, 0.0
    %v397 = vadd.f32 %v393, 1e-05
    %v398 = vadd.f32 %v394, 1e-05
    %v399 = vadd.f32 %v395, 1e-05
    %v400 = vadd.f32 %v396, 1e-05
    %v401 = vrsqrt.pop %v397
    %v402 = vrsqrt.pop %v398
    %v403 = vrsqrt.pop %v399
    %v404 = vrsqrt.pop %v400
    %v405 = vmul.f32 %v19, %v401
    %v406 = vmul.f32 %v20, %v402
    %v407 = vmul.f32 %v21, %v403
    %v408 = vmul.f32 %v22, %v404
    %v409 = vmul.f32 %v377, %v405
    %v410 = vmul.f32 %v378, %v406
    %v411 = vmul.f32 %v379, %v407
    %v412 = vmul.f32 %v380, %v408
    %417 = vrot.lane.b32.xlu0 %v409, 1
    %v418 = vpop.permute.xlu0 %417
    %419 = vrot.lane.b32.xlu0 %v410, 1
    %v420 = vpop.permute.xlu0 %419
    %421 = vrot.lane.b32.xlu0 %v411, 1
    %v422 = vpop.permute.xlu0 %421
    %423 = vrot.lane.b32.xlu0 %v412, 1
    %v424 = vpop.permute.xlu0 %423
    %v429 = vsub.f32 %v19, %v418
    %v430 = vsub.f32 %v20, %v420
    %v431 = vsub.f32 %v21, %v422
    %v432 = vsub.f32 %v22, %v424
    %434 = vset.pattern.permute.xlu0 1
    %435 = vperm.xlu0 %434, %v405
    %v436 = vpop.permute.xlu0 %435
    %439 = vset.pattern.permute.xlu0 1
    %440 = vperm.xlu0 %439, %v406
    %v441 = vpop.permute.xlu0 %440
    %444 = vset.pattern.permute.xlu0 1
    %445 = vperm.xlu0 %444, %v407
    %v446 = vpop.permute.xlu0 %445
    %449 = vset.pattern.permute.xlu0 1
    %450 = vperm.xlu0 %449, %v408
    %v451 = vpop.permute.xlu0 %450
    %v453 = vmul.f32 %v160, %v436
    %v454 = vmul.f32 %v161, %v436
    %v455 = vmul.f32 %v162, %v441
    %v456 = vmul.f32 %v163, %v441
    %v457 = vmul.f32 %v164, %v446
    %v458 = vmul.f32 %v165, %v446
    %v459 = vmul.f32 %v166, %v451
    %v460 = vmul.f32 %v167, %v451
    %462 = vset.pattern.permute.xlu0 2
    %463 = vperm.xlu0 %462, %v429
    %v464 = vpop.permute.xlu0 %463
    %467 = vset.pattern.permute.xlu0 2
    %468 = vperm.xlu0 %467, %v430
    %v469 = vpop.permute.xlu0 %468
    %472 = vset.pattern.permute.xlu0 2
    %473 = vperm.xlu0 %472, %v431
    %v474 = vpop.permute.xlu0 %473
    %477 = vset.pattern.permute.xlu0 2
    %478 = vperm.xlu0 %477, %v432
    %v479 = vpop.permute.xlu0 %478
    %v481 = vadd.f32 %v453, %v464
    %v482 = vadd.f32 %v454, %v464
    %v483 = vadd.f32 %v455, %v469
    %v484 = vadd.f32 %v456, %v469
    %v485 = vadd.f32 %v457, %v474
    %v486 = vadd.f32 %v458, %v474
    %v487 = vadd.f32 %v459, %v479
    %v488 = vadd.f32 %v460, %v479
    %489 = vst [vmem:[#allocation2] sm:$0xff] %v481
    %490 = vst.msk [vmem:[#allocation2 + $0x8] sm:$0xff] %vm168, %v482
    %491 = vst [vmem:[#allocation2 + $0x10] sm:$0xff] %v483
    %492 = vst.msk [vmem:[#allocation2 + $0x18] sm:$0xff] %vm168, %v484
    %493 = vst [vmem:[#allocation2 + $0x20] sm:$0xff] %v485
    %494 = vst.msk [vmem:[#allocation2 + $0x28] sm:$0xff] %vm168, %v486
    %495 = vst [vmem:[#allocation2 + $0x30] sm:$0xff] %v487
    %496 = vst.msk [vmem:[#allocation2 + $0x38] sm:$0xff] %vm168, %v488
    %v497 = vmul.f32 %v321, %v436
    %v498 = vmul.f32 %v322, %v436
    %v499 = vmul.f32 %v323, %v441
    %v500 = vmul.f32 %v324, %v441
    %v501 = vmul.f32 %v325, %v446
    %v502 = vmul.f32 %v326, %v446
    %v503 = vmul.f32 %v327, %v451
    %v504 = vmul.f32 %v328, %v451
    %v505 = vadd.f32 %v497, %v464
    %v506 = vadd.f32 %v498, %v464
    %v507 = vadd.f32 %v499, %v469
    %v508 = vadd.f32 %v500, %v469
    %v509 = vadd.f32 %v501, %v474
    %v510 = vadd.f32 %v502, %v474
    %v511 = vadd.f32 %v503, %v479
    %v512 = vadd.f32 %v504, %v479
    %s513 = scalar_lea.vmem [#allocation2], 64
    %514 = vst [vmem:[%s513] sm:$0xff] %v505
    %515 = vst.msk [vmem:[%s513 + $0x8] sm:$0xff] %vm168, %v506
    %516 = vst [vmem:[%s513 + $0x10] sm:$0xff] %v507
    %517 = vst.msk [vmem:[%s513 + $0x18] sm:$0xff] %vm168, %v508
    %518 = vst [vmem:[%s513 + $0x20] sm:$0xff] %v509
    %519 = vst.msk [vmem:[%s513 + $0x28] sm:$0xff] %vm168, %v510
    %520 = vst [vmem:[%s513 + $0x30] sm:$0xff] %v511
    %521 = vst.msk [vmem:[%s513 + $0x38] sm:$0xff] %vm168, %v512
    // Predicated region
    $region14: #{tpu_custom_call.1} parent=1 // pred_check
      _
    $region15: #{tpu_custom_call.1} parent=1 // pred_check_branch
      %523 = sbr.rel (0) target = $region17
    $region16: #{tpu_custom_call.1} parent=1 // pred_region
      %s525 = ssub.s32 2048, 2048
      %526 = vsyncadd [#allocation3], %s525
      %s527 = sshll.u32 [#allocation2], 4
      %s528 = int_to_ptr.vmem [resolvable:$true] %s527
      %533 = dma.vmem_to_hbm [thread:$0]  %s528, 2048, %s3, [#allocation3], 256, 256, 16
    $region17: #{tpu_custom_call.1} parent=1 // pred_fallthru
      _
    // Predicated region
    $region18: #{tpu_custom_call.1} parent=1 // pred_check
      _
    $region19: #{tpu_custom_call.1} parent=1 // pred_check_branch
      %535 = sbr.rel (0) target = $region21
    $region20: #{tpu_custom_call.1} parent=1 // pred_region
      %536 = dma.done [#allocation3], 2048
    $region21: #{tpu_custom_call.1} parent=1 // pred_fallthru
      _
    %537 = vsyncpa [#allocation3], 1

</llo_original>
